<compile_context>
chip_gen: v7x
topology: tpu7x:2x2x1
jax: 0.10.0
libtpu: 0.0.40
codegen_flags: <defaults>
</compile_context>

<pallas_src>
import functools

import jax
import jax.numpy as jnp
import numpy as np
from jax.experimental import pallas as pl
from jax.experimental.pallas import tpu as pltpu


# ----------------------------- Pallas kernel --------------------------------

def basic_block_kernel(*refs, H, W, has_projection):
    if has_projection:
        (x_ref, mask_ref, b1_ref, w1_ref, w2_ref, b2_ref,
         wsc_ref, bsc_ref, out_ref, h1_ref) = refs
    else:
        (x_ref, mask_ref, b1_ref, w1_ref, w2_ref, b2_ref,
         out_ref, h1_ref) = refs
        wsc_ref = bsc_ref = None

    Wp = W + 2                 # padded row width
    L = H * Wp                 # flat "output" domain (includes W-halo columns)
    C_in = x_ref.shape[1]
    C_out = out_ref.shape[1]

    # x in flat padded layout: (C_in, (H+2)*(W+2) + 2), f32, zero halo.
    xv = x_ref[0]

    # ---- conv1: single im2col matmul (C_out, 9*C_in) @ (9*C_in, L) on the MXU.
    # Tap (dy, dx) is a static lane-offset slice of the flat padded buffer.
    p1 = jnp.concatenate(
        [xv[:, dy * Wp + dx: dy * Wp + dx + L]
         for dy in range(3) for dx in range(3)], axis=0)
    acc1 = jnp.dot(w1_ref[...], p1.astype(w1_ref.dtype),
                   preferred_element_type=jnp.float32)        # (C_out, L) f32
    # BN1 scale is folded into w1; bias folds BN1 shift + time-MLP shift (per n).
    # mask zeroes the wrap-around halo columns so they act as conv2's W-halo.
    h1 = jnp.maximum(acc1 + b1_ref[0], 0.0) * mask_ref[...]

    # ---- re-pad hidden activation via persistent VMEM scratch (flat layout).
    h1_ref[...] = jnp.zeros_like(h1_ref)
    h1_ref[:, Wp + 1: Wp + 1 + L] = h1
    hv = h1_ref[...]                                          # (C_out, Lp) f32

    # ---- conv2: single im2col matmul (C_out, 9*C_out) @ (9*C_out, L).
    p2 = jnp.concatenate(
        [hv[:, dy * Wp + dx: dy * Wp + dx + L]
         for dy in range(3) for dx in range(3)], axis=0)
    acc2 = jnp.dot(w2_ref[...], p2.astype(w2_ref.dtype),
                   preferred_element_type=jnp.float32) + b2_ref[...]

    # ---- shortcut
    x_int = xv[:, Wp + 1: Wp + 1 + L]                         # (C_in, L) f32
    if has_projection:
        sc = jnp.dot(wsc_ref[...], x_int.astype(wsc_ref.dtype),
                     preferred_element_type=jnp.float32) + bsc_ref[...]
    else:
        sc = x_int                                            # identity: C_in == C_out

    out_ref[0] = jnp.maximum(acc2 + sc, 0.0)                  # (C_out, L), lane-dense


# ------------------------------- wrapper -------------------------------------

def _fold_bn(gamma, beta, mean, var, eps=1e-5):
    s = gamma / jnp.sqrt(var + eps)
    return s, beta - mean * s


def basic_block_forward(x_nchw, t, params):
    N, C_in, H, W = x_nchw.shape
    C_out = params["w1"].shape[-1]
    Wp = W + 2
    L = H * Wp
    Lp = (H + 2) * Wp + 2

    # time MLP in plain JAX (tiny: N x time_c), folded into conv1's bias.
    tshift = (jnp.maximum(t @ params["mlp_wa"] + params["mlp_ba"], 0.0)
              @ params["mlp_wb"] + params["mlp_bb"])          # (N, C_out)

    s1, b1 = _fold_bn(params["bn1_g"], params["bn1_b"], params["bn1_m"], params["bn1_v"])
    s2, b2 = _fold_bn(params["bn2_g"], params["bn2_b"], params["bn2_m"], params["bn2_v"])

    # fold BN scales into weights; reshape to (C_out, 9*C) for the (C, pixels) layout.
    w1_eff = (jnp.transpose(params["w1"], (3, 0, 1, 2)).reshape(C_out, 9 * C_in)
              * s1[:, None]).astype(jnp.bfloat16)
    w2_eff = (jnp.transpose(params["w2"], (3, 0, 1, 2)).reshape(C_out, 9 * C_out)
              * s2[:, None]).astype(jnp.bfloat16)
    b1_eff = (b1[None, :] + tshift).reshape(N, C_out, 1)       # per-batch bias
    b2_eff = b2.reshape(C_out, 1)

    has_projection = params.get("wsc") is not None
    if has_projection:
        ssc, bsc = _fold_bn(params["bnsc_g"], params["bnsc_b"],
                            params["bnsc_m"], params["bnsc_v"])
        wsc_eff = (params["wsc"].T * ssc[:, None]).astype(jnp.bfloat16)  # (C_out, C_in)
        bsc_eff = bsc.reshape(C_out, 1)
    else:
        assert C_in == C_out, "identity shortcut requires in_c == out_c"

    # flat padded input: pad spatially by 1, flatten (H+2, W+2), pad flat axis by 1.
    x_pad = jnp.pad(x_nchw, ((0, 0), (0, 0), (1, 1), (1, 1)))
    x_flat = jnp.pad(x_pad.reshape(N, C_in, (H + 2) * Wp), ((0, 0), (0, 0), (1, 1)))

    # mask zeroing the wrap-around (halo) columns of the flat output domain.
    col = jnp.arange(L) % Wp
    mask = ((col != 0) & (col != Wp - 1)).astype(jnp.float32).reshape(1, L)

    in_specs = [
        pl.BlockSpec((1, C_in, Lp), lambda n: (n, 0, 0)),
        pl.BlockSpec((1, L), lambda n: (0, 0)),
        pl.BlockSpec((1, C_out, 1), lambda n: (n, 0, 0)),
        pl.BlockSpec((C_out, 9 * C_in), lambda n: (0, 0)),
        pl.BlockSpec((C_out, 9 * C_out), lambda n: (0, 0)),
        pl.BlockSpec((C_out, 1), lambda n: (0, 0)),
    ]
    args = [x_flat, mask, b1_eff, w1_eff, w2_eff, b2_eff]
    if has_projection:
        in_specs += [pl.BlockSpec((C_out, C_in), lambda n: (0, 0)),
                     pl.BlockSpec((C_out, 1), lambda n: (0, 0))]
        args += [wsc_eff, bsc_eff]

    flops = 2 * N * H * W * C_out * (9 * C_in + 9 * C_out
                                     + (C_in if has_projection else 0))
    bytes_accessed = (x_flat.size * 4 + mask.size * 4 + b1_eff.size * 4
                      + w1_eff.size * 2 + w2_eff.size * 2 + b2_eff.size * 4
                      + N * C_out * L * 4)
    if has_projection:
        bytes_accessed += wsc_eff.size * 2 + bsc_eff.size * 4

    out_flat = pl.pallas_call(
        functools.partial(basic_block_kernel, H=H, W=W,
                          has_projection=has_projection),
        out_shape=jax.ShapeDtypeStruct((N, C_out, L), jnp.float32),
        grid=(N,),
        in_specs=in_specs,
        out_specs=pl.BlockSpec((1, C_out, L), lambda n: (n, 0, 0)),
        scratch_shapes=[pltpu.VMEM((C_out, Lp), jnp.float32)],
        compiler_params=pltpu.CompilerParams(dimension_semantics=("parallel",)),
        cost_estimate=pl.CostEstimate(flops=flops, transcendentals=0,
                                      bytes_accessed=bytes_accessed),
    )(*args)

    # drop the halo columns and recover NCHW (cheap metadata/slice in XLA).
    return out_flat.reshape(N, C_out, H, Wp)[:, :, :, 1:W + 1]


# ------------------------- pure-JAX reference ---------------------------------

def ref_forward(x, t, params, eps=1e-5):
    dn = ("NCHW", "HWIO", "NCHW")
    conv = lambda z, w: jax.lax.conv_general_dilated(z, w, (1, 1), "SAME",
                                                     dimension_numbers=dn)
    bn = lambda z, g, b, m, v: ((z - m[None, :, None, None])
                                / jnp.sqrt(v + eps)[None, :, None, None]
                                * g[None, :, None, None] + b[None, :, None, None])
    tshift = (jnp.maximum(t @ params["mlp_wa"] + params["mlp_ba"], 0.0)
              @ params["mlp_wb"] + params["mlp_bb"])
    h = bn(conv(x, params["w1"]), params["bn1_g"], params["bn1_b"],
           params["bn1_m"], params["bn1_v"])
    h = jnp.maximum(h + tshift[:, :, None, None], 0.0)
    h = bn(conv(h, params["w2"]), params["bn2_g"], params["bn2_b"],
           params["bn2_m"], params["bn2_v"])
    if params.get("wsc") is not None:
        sc = jnp.einsum("nchw,cd->ndhw", x, params["wsc"])
        sc = bn(sc, params["bnsc_g"], params["bnsc_b"],
                params["bnsc_m"], params["bnsc_v"])
    else:
        sc = x
    return jnp.maximum(h + sc, 0.0)


# --------------------------------- main ----------------------------------------

if __name__ == "__main__":
    f32 = jnp.float32

    def make_params(key, in_c, out_c, time_c, projection):
        ks = jax.random.split(key, 20)
        p = dict(
            w1=0.1 * jax.random.normal(ks[0], (3, 3, in_c, out_c), f32),
            bn1_g=jax.random.uniform(ks[1], (out_c,), f32, 0.5, 1.5),
            bn1_b=0.1 * jax.random.normal(ks[2], (out_c,), f32),
            bn1_m=0.1 * jax.random.normal(ks[3], (out_c,), f32),
            bn1_v=jax.random.uniform(ks[4], (out_c,), f32, 0.5, 1.5),
            w2=0.1 * jax.random.normal(ks[5], (3, 3, out_c, out_c), f32),
            bn2_g=jax.random.uniform(ks[6], (out_c,), f32, 0.5, 1.5),
            bn2_b=0.1 * jax.random.normal(ks[7], (out_c,), f32),
            bn2_m=0.1 * jax.random.normal(ks[8], (out_c,), f32),
            bn2_v=jax.random.uniform(ks[9], (out_c,), f32, 0.5, 1.5),
            mlp_wa=0.1 * jax.random.normal(ks[10], (time_c, time_c), f32),
            mlp_ba=0.1 * jax.random.normal(ks[11], (time_c,), f32),
            mlp_wb=0.1 * jax.random.normal(ks[12], (time_c, out_c), f32),
            mlp_bb=0.1 * jax.random.normal(ks[13], (out_c,), f32),
        )
        if projection:
            p.update(
                wsc=0.1 * jax.random.normal(ks[14], (in_c, out_c), f32),
                bnsc_g=jax.random.uniform(ks[15], (out_c,), f32, 0.5, 1.5),
                bnsc_b=0.1 * jax.random.normal(ks[16], (out_c,), f32),
                bnsc_m=0.1 * jax.random.normal(ks[17], (out_c,), f32),
                bnsc_v=jax.random.uniform(ks[18], (out_c,), f32, 0.5, 1.5),
            )
        return p

    N, time_c, H, W = 2, 32, 16, 16
    k1, k2, kx, kt = jax.random.split(jax.random.PRNGKey(0), 4)
    t = jax.random.normal(kt, (N, time_c), f32)

    fwd = jax.jit(basic_block_forward)

    # ---- projection shortcut path (in_c != out_c)
    in_c, out_c = 4, 8
    params = make_params(k1, in_c, out_c, time_c, projection=True)
    x = jax.random.normal(kx, (N, in_c, H, W), f32)
    out = jax.block_until_ready(fwd(x, t, params))
    ref = ref_forward(x, t, params)
    np.testing.assert_allclose(np.asarray(out), np.asarray(ref), rtol=2e-2, atol=2e-2)
    assert out.shape == (N, out_c, H, W)

    # ---- identity shortcut path (in_c == out_c)
    in_c = out_c = 8
    params_id = make_params(k2, in_c, out_c, time_c, projection=False)
    x_id = jax.random.normal(kx, (N, in_c, H, W), f32)
    out_id = jax.block_until_ready(fwd(x_id, t, params_id))
    ref_id = ref_forward(x_id, t, params_id)
    np.testing.assert_allclose(np.asarray(out_id), np.asarray(ref_id),
                               rtol=2e-2, atol=2e-2)
    assert out_id.shape == (N, out_c, H, W)

    print("KERNEL_OK")
</pallas_src>

<mosaic_0001>
module attributes {stable_mosaic.version = 11 : i64} {
  func.func @basic_block_kernel(%arg0: i32, %arg1: memref<1x4x326xf32, #tpu.memory_space<vmem>>, %arg2: memref<1x288xf32, #tpu.memory_space<vmem>>, %arg3: memref<1x8x1xf32, #tpu.memory_space<vmem>>, %arg4: memref<8x36xbf16, #tpu.memory_space<vmem>>, %arg5: memref<8x72xbf16, #tpu.memory_space<vmem>>, %arg6: memref<8x1xf32, #tpu.memory_space<vmem>>, %arg7: memref<8x4xbf16, #tpu.memory_space<vmem>>, %arg8: memref<8x1xf32, #tpu.memory_space<vmem>>, %arg9: memref<1x8x288xf32, #tpu.memory_space<vmem>>, %arg10: memref<8x326xf32, #tpu.memory_space<vmem>>) attributes {dimension_semantics = [#tpu.dimension_semantics<parallel>], iteration_bounds = array<i64: 2>, scalar_prefetch = 0 : i64, scratch_operands = 1 : i64, tpu.core_type = #tpu.core_type<tc>, window_params = [{transform_indices = @transform_0, window_bounds = array<i64: 1, 4, 326>}, {pipeline_mode = #tpu.pipeline_mode<synchronous>, transform_indices = @transform_1, window_bounds = array<i64: 1, 288>}, {transform_indices = @transform_2, window_bounds = array<i64: 1, 8, 1>}, {pipeline_mode = #tpu.pipeline_mode<synchronous>, transform_indices = @transform_3, window_bounds = array<i64: 8, 36>}, {pipeline_mode = #tpu.pipeline_mode<synchronous>, transform_indices = @transform_4, window_bounds = array<i64: 8, 72>}, {pipeline_mode = #tpu.pipeline_mode<synchronous>, transform_indices = @transform_5, window_bounds = array<i64: 8, 1>}, {pipeline_mode = #tpu.pipeline_mode<synchronous>, transform_indices = @transform_6, window_bounds = array<i64: 8, 4>}, {pipeline_mode = #tpu.pipeline_mode<synchronous>, transform_indices = @transform_7, window_bounds = array<i64: 8, 1>}, {transform_indices = @transform_8, window_bounds = array<i64: 1, 8, 288>}]} {
    %c0 = arith.constant 0 : index
    %c0_0 = arith.constant 0 : index
    %c0_1 = arith.constant 0 : index
    %0 = vector.load %arg1[%c0, %c0_0, %c0_1] : memref<1x4x326xf32, #tpu.memory_space<vmem>>, vector<1x4x326xf32>
    %1 = vector.shape_cast %0 : vector<1x4x326xf32> to vector<4x326xf32>
    %2 = vector.extract_strided_slice %1 {offsets = [0, 0], sizes = [4, 288], strides = [1, 1]} : vector<4x326xf32> to vector<4x288xf32>
    %3 = vector.extract_strided_slice %1 {offsets = [0, 1], sizes = [4, 288], strides = [1, 1]} : vector<4x326xf32> to vector<4x288xf32>
    %4 = vector.extract_strided_slice %1 {offsets = [0, 2], sizes = [4, 288], strides = [1, 1]} : vector<4x326xf32> to vector<4x288xf32>
    %5 = vector.extract_strided_slice %1 {offsets = [0, 18], sizes = [4, 288], strides = [1, 1]} : vector<4x326xf32> to vector<4x288xf32>
    %6 = vector.extract_strided_slice %1 {offsets = [0, 19], sizes = [4, 288], strides = [1, 1]} : vector<4x326xf32> to vector<4x288xf32>
    %7 = vector.extract_strided_slice %1 {offsets = [0, 20], sizes = [4, 288], strides = [1, 1]} : vector<4x326xf32> to vector<4x288xf32>
    %8 = vector.extract_strided_slice %1 {offsets = [0, 36], sizes = [4, 288], strides = [1, 1]} : vector<4x326xf32> to vector<4x288xf32>
    %9 = vector.extract_strided_slice %1 {offsets = [0, 37], sizes = [4, 288], strides = [1, 1]} : vector<4x326xf32> to vector<4x288xf32>
    %10 = vector.extract_strided_slice %1 {offsets = [0, 38], sizes = [4, 288], strides = [1, 1]} : vector<4x326xf32> to vector<4x288xf32>
    %11 = tpu.concatenate %2, %3, %4, %5, %6, %7, %8, %9, %10 in 0 : vector<4x288xf32>, vector<4x288xf32>, vector<4x288xf32>, vector<4x288xf32>, vector<4x288xf32>, vector<4x288xf32>, vector<4x288xf32>, vector<4x288xf32>, vector<4x288xf32> -> vector<36x288xf32>
    %c0_2 = arith.constant 0 : index
    %c0_3 = arith.constant 0 : index
    %12 = vector.load %arg4[%c0_2, %c0_3] : memref<8x36xbf16, #tpu.memory_space<vmem>>, vector<8x36xbf16>
    %13 = arith.truncf %11 : vector<36x288xf32> to vector<36x288xbf16>
    %cst = arith.constant dense<0.000000e+00> : vector<8x288xf32>
    %14 = tpu.matmul %12, %13, %cst {dimension_numbers = #tpu.dot_dimension_numbers<[1], [0], [0], [1], [0, 0, 1, 1], [], []>} : vector<8x36xbf16>, vector<36x288xbf16>, vector<8x288xf32> -> vector<8x288xf32>
    %c0_4 = arith.constant 0 : index
    %c0_5 = arith.constant 0 : index
    %c0_6 = arith.constant 0 : index
    %15 = vector.load %arg3[%c0_4, %c0_5, %c0_6] : memref<1x8x1xf32, #tpu.memory_space<vmem>>, vector<1x8x1xf32>
    %16 = vector.shape_cast %15 : vector<1x8x1xf32> to vector<8x1xf32>
    %17 = vector.broadcast %16 : vector<8x1xf32> to vector<8x288xf32>
    %18 = arith.addf %14, %17 : vector<8x288xf32>
    %cst_7 = arith.constant 0.000000e+00 : f32
    %19 = vector.broadcast %cst_7 : f32 to vector<8x288xf32>
    %20 = arith.maximumf %18, %19 : vector<8x288xf32>
    %c0_8 = arith.constant 0 : index
    %c0_9 = arith.constant 0 : index
    %21 = vector.load %arg2[%c0_8, %c0_9] : memref<1x288xf32, #tpu.memory_space<vmem>>, vector<1x288xf32>
    %22 = vector.broadcast %21 : vector<1x288xf32> to vector<8x288xf32>
    %23 = arith.mulf %20, %22 : vector<8x288xf32>
    %cst_10 = arith.constant 0.000000e+00 : f32
    %24 = vector.broadcast %cst_10 : f32 to vector<8x326xf32>
    %c0_11 = arith.constant 0 : index
    %c0_12 = arith.constant 0 : index
    %25 = vector.load %arg10[%c0_11, %c0_12] : memref<8x326xf32, #tpu.memory_space<vmem>>, vector<8x326xf32>
    tpu.vector_store %arg10[%c0_11, %c0_12], %24 {strides = array<i32>} : memref<8x326xf32, #tpu.memory_space<vmem>>, vector<8x326xf32>,
    %c0_13 = arith.constant 0 : index
    %c19 = arith.constant 19 : index
    %26 = vector.load %arg10[%c0_13, %c19] : memref<8x326xf32, #tpu.memory_space<vmem>>, vector<8x288xf32>
    tpu.vector_store %arg10[%c0_13, %c19], %23 {strides = array<i32>} : memref<8x326xf32, #tpu.memory_space<vmem>>, vector<8x288xf32>,
    %c0_14 = arith.constant 0 : index
    %c0_15 = arith.constant 0 : index
    %27 = vector.load %arg10[%c0_14, %c0_15] : memref<8x326xf32, #tpu.memory_space<vmem>>, vector<8x326xf32>
    %28 = vector.extract_strided_slice %27 {offsets = [0, 0], sizes = [8, 288], strides = [1, 1]} : vector<8x326xf32> to vector<8x288xf32>
    %29 = vector.extract_strided_slice %27 {offsets = [0, 1], sizes = [8, 288], strides = [1, 1]} : vector<8x326xf32> to vector<8x288xf32>
    %30 = vector.extract_strided_slice %27 {offsets = [0, 2], sizes = [8, 288], strides = [1, 1]} : vector<8x326xf32> to vector<8x288xf32>
    %31 = vector.extract_strided_slice %27 {offsets = [0, 18], sizes = [8, 288], strides = [1, 1]} : vector<8x326xf32> to vector<8x288xf32>
    %32 = vector.extract_strided_slice %27 {offsets = [0, 19], sizes = [8, 288], strides = [1, 1]} : vector<8x326xf32> to vector<8x288xf32>
    %33 = vector.extract_strided_slice %27 {offsets = [0, 20], sizes = [8, 288], strides = [1, 1]} : vector<8x326xf32> to vector<8x288xf32>
    %34 = vector.extract_strided_slice %27 {offsets = [0, 36], sizes = [8, 288], strides = [1, 1]} : vector<8x326xf32> to vector<8x288xf32>
    %35 = vector.extract_strided_slice %27 {offsets = [0, 37], sizes = [8, 288], strides = [1, 1]} : vector<8x326xf32> to vector<8x288xf32>
    %36 = vector.extract_strided_slice %27 {offsets = [0, 38], sizes = [8, 288], strides = [1, 1]} : vector<8x326xf32> to vector<8x288xf32>
    %37 = tpu.concatenate %28, %29, %30, %31, %32, %33, %34, %35, %36 in 0 : vector<8x288xf32>, vector<8x288xf32>, vector<8x288xf32>, vector<8x288xf32>, vector<8x288xf32>, vector<8x288xf32>, vector<8x288xf32>, vector<8x288xf32>, vector<8x288xf32> -> vector<72x288xf32>
    %c0_16 = arith.constant 0 : index
    %c0_17 = arith.constant 0 : index
    %38 = vector.load %arg5[%c0_16, %c0_17] : memref<8x72xbf16, #tpu.memory_space<vmem>>, vector<8x72xbf16>
    %39 = arith.truncf %37 : vector<72x288xf32> to vector<72x288xbf16>
    %cst_18 = arith.constant dense<0.000000e+00> : vector<8x288xf32>
    %40 = tpu.matmul %38, %39, %cst_18 {dimension_numbers = #tpu.dot_dimension_numbers<[1], [0], [0], [1], [0, 0, 1, 1], [], []>} : vector<8x72xbf16>, vector<72x288xbf16>, vector<8x288xf32> -> vector<8x288xf32>
    %c0_19 = arith.constant 0 : index
    %c0_20 = arith.constant 0 : index
    %41 = vector.load %arg6[%c0_19, %c0_20] : memref<8x1xf32, #tpu.memory_space<vmem>>, vector<8x1xf32>
    %42 = vector.broadcast %41 : vector<8x1xf32> to vector<8x288xf32>
    %43 = arith.addf %40, %42 : vector<8x288xf32>
    %44 = vector.extract_strided_slice %1 {offsets = [0, 19], sizes = [4, 288], strides = [1, 1]} : vector<4x326xf32> to vector<4x288xf32>
    %c0_21 = arith.constant 0 : index
    %c0_22 = arith.constant 0 : index
    %45 = vector.load %arg7[%c0_21, %c0_22] : memref<8x4xbf16, #tpu.memory_space<vmem>>, vector<8x4xbf16>
    %46 = arith.truncf %44 : vector<4x288xf32> to vector<4x288xbf16>
    %cst_23 = arith.constant dense<0.000000e+00> : vector<8x288xf32>
    %47 = tpu.matmul %45, %46, %cst_23 {dimension_numbers = #tpu.dot_dimension_numbers<[1], [0], [0], [1], [0, 0, 1, 1], [], []>} : vector<8x4xbf16>, vector<4x288xbf16>, vector<8x288xf32> -> vector<8x288xf32>
    %c0_24 = arith.constant 0 : index
    %c0_25 = arith.constant 0 : index
    %48 = vector.load %arg8[%c0_24, %c0_25] : memref<8x1xf32, #tpu.memory_space<vmem>>, vector<8x1xf32>
    %49 = vector.broadcast %48 : vector<8x1xf32> to vector<8x288xf32>
    %50 = arith.addf %47, %49 : vector<8x288xf32>
    %51 = arith.addf %43, %50 : vector<8x288xf32>
    %cst_26 = arith.constant 0.000000e+00 : f32
    %52 = vector.broadcast %cst_26 : f32 to vector<8x288xf32>
    %53 = arith.maximumf %51, %52 : vector<8x288xf32>
    %c0_27 = arith.constant 0 : index
    %c0_28 = arith.constant 0 : index
    %c0_29 = arith.constant 0 : index
    %54 = vector.load %arg9[%c0_27, %c0_28, %c0_29] : memref<1x8x288xf32, #tpu.memory_space<vmem>>, vector<1x8x288xf32>
    %55 = vector.shape_cast %54 : vector<1x8x288xf32> to vector<8x288xf32>
    %56 = vector.shape_cast %53 : vector<8x288xf32> to vector<1x8x288xf32>
    tpu.vector_store %arg9[%c0_27, %c0_28, %c0_29], %56 {strides = array<i32>} : memref<1x8x288xf32, #tpu.memory_space<vmem>>, vector<1x8x288xf32>,
    return
  }
  func.func @transform_0(%arg0: i32) -> (i32, i32, i32) {
    %c0_i32 = arith.constant 0 : i32
    %c0_i32_0 = arith.constant 0 : i32
    %c0_i32_1 = arith.constant 0 : i32
    return %arg0, %c0_i32, %c0_i32_0 : i32, i32, i32
  }
  func.func @transform_1(%arg0: i32) -> (i32, i32) {
    %c0_i32 = arith.constant 0 : i32
    %c0_i32_0 = arith.constant 0 : i32
    %c0_i32_1 = arith.constant 0 : i32
    return %c0_i32, %c0_i32_0 : i32, i32
  }
  func.func @transform_2(%arg0: i32) -> (i32, i32, i32) {
    %c0_i32 = arith.constant 0 : i32
    %c0_i32_0 = arith.constant 0 : i32
    %c0_i32_1 = arith.constant 0 : i32
    return %arg0, %c0_i32, %c0_i32_0 : i32, i32, i32
  }
  func.func @transform_3(%arg0: i32) -> (i32, i32) {
    %c0_i32 = arith.constant 0 : i32
    %c0_i32_0 = arith.constant 0 : i32
    %c0_i32_1 = arith.constant 0 : i32
    return %c0_i32, %c0_i32_0 : i32, i32
  }
  func.func @transform_4(%arg0: i32) -> (i32, i32) {
    %c0_i32 = arith.constant 0 : i32
    %c0_i32_0 = arith.constant 0 : i32
    %c0_i32_1 = arith.constant 0 : i32
    return %c0_i32, %c0_i32_0 : i32, i32
  }
  func.func @transform_5(%arg0: i32) -> (i32, i32) {
    %c0_i32 = arith.constant 0 : i32
    %c0_i32_0 = arith.constant 0 : i32
    %c0_i32_1 = arith.constant 0 : i32
    return %c0_i32, %c0_i32_0 : i32, i32
  }
  func.func @transform_6(%arg0: i32) -> (i32, i32) {
    %c0_i32 = arith.constant 0 : i32
    %c0_i32_0 = arith.constant 0 : i32
    %c0_i32_1 = arith.constant 0 : i32
    return %c0_i32, %c0_i32_0 : i32, i32
  }
  func.func @transform_7(%arg0: i32) -> (i32, i32) {
    %c0_i32 = arith.constant 0 : i32
    %c0_i32_0 = arith.constant 0 : i32
    %c0_i32_1 = arith.constant 0 : i32
    return %c0_i32, %c0_i32_0 : i32, i32
  }
  func.func @transform_8(%arg0: i32) -> (i32, i32, i32) {
    %c0_i32 = arith.constant 0 : i32
    %c0_i32_0 = arith.constant 0 : i32
    %c0_i32_1 = arith.constant 0 : i32
    return %arg0, %c0_i32, %c0_i32_0 : i32, i32, i32
  }
}

</mosaic_0001>

<llo_original>
// kernel: basic_block_forward.1
$region0: #{basic_block_forward.1}
  #allocation0 [shape = 'u32[]', space=smem, size = 0x4, offset = 0x4, fixed_abs, tag = 'smem constant byte address 0x4 - core index']
  #allocation1 [shape = 'u32[144,128]{1,0:T(1,128)}', space=vmem, size = 0x12000, scoped, tag = 'internal scratch']
  #allocation2 [shape = 'f32[8,326]{1,0:T(8,128)}', space=vmem, size = 0x3000, scoped, tag = 'scratch operand']
  %s0 = inlined_call_operand.vmem [shape: f32[2,4,326], index: 0, kind: input, shape index: {}]
  %s1 = inlined_call_operand.vmem [shape: f32[1,288], index: 1, kind: input, shape index: {}]
  %s2 = inlined_call_operand.vmem [shape: f32[2,8,1], index: 2, kind: input, shape index: {}]
  %s3 = inlined_call_operand.vmem [shape: bf16[8,36], index: 3, kind: input, shape index: {}]
  %s4 = inlined_call_operand.vmem [shape: bf16[8,72], index: 4, kind: input, shape index: {}]
  %s5 = inlined_call_operand.vmem [shape: f32[8,1], index: 5, kind: input, shape index: {}]
  %s6 = inlined_call_operand.vmem [shape: bf16[8,4], index: 6, kind: input, shape index: {}]
  %s7 = inlined_call_operand.vmem [shape: f32[8,1], index: 7, kind: input, shape index: {}]
  %s8 = inlined_call_operand.vmem [shape: f32[2,8,288], index: 8, kind: output, shape index: {}]
  %s9 = sld [smem:[#allocation0]]
  $region65: #{basic_block_forward.1} parent=0
    _
  %s11 = ssub.s32 1, %s9
  %s12 = scalar_select 0, %s11, %s9
  loop: start=0, step=1, limit=4
  $region2: #{basic_block_forward.1} parent=0 // loop_pre_header
    _
  $region3: #{basic_block_forward.1} parent=0 // loop_header
    %s14 = sphi 0, %s18
    %p15 = scmp.ge.s32.totalorder %s14, 4
    %s24 = sphi 0, %s26
    %s27 = sphi 0, %s24
    %s28 = sphi 0, %s27
    %s44 = sphi 0, %s28
    %s48 = sphi 0, %s48
    %s50 = sphi 0, %s48
    %s51 = sphi 0, %s50
    %s65 = sphi 0, %s51
    %s71 = sphi 0, %s73
    %s74 = sphi 0, %s71
    %s75 = sphi 0, %s74
    %s91 = sphi 0, %s75
    %s95 = sphi 0, %s95
    %s97 = sphi 0, %s95
    %s98 = sphi 0, %s97
    %s112 = sphi 0, %s98
    %s116 = sphi 0, %s116
    %s118 = sphi 0, %s116
    %s119 = sphi 0, %s118
    %s133 = sphi 0, %s119
    %s137 = sphi 0, %s137
    %s139 = sphi 0, %s137
    %s140 = sphi 0, %s139
    %s154 = sphi 0, %s140
    %s158 = sphi 0, %s158
    %s160 = sphi 0, %s158
    %s161 = sphi 0, %s160
    %s175 = sphi 0, %s161
    %s179 = sphi 0, %s179
    %s181 = sphi 0, %s179
    %s182 = sphi 0, %s181
    %s196 = sphi 0, %s182
    %s202 = sphi 0, %s204
    %s205 = sphi 0, %s202
    %s206 = sphi 0, %s205
    %s222 = sphi 0, %s206
  $region4: #{basic_block_forward.1} parent=0 // loop_header_branch
    %17 = sbr.rel (%p15) target = $region8
  $region5: #{basic_block_forward.1} parent=0 // loop_body
    %s19 = ssub.s32 %s14, 1
    %s20 = ssub.s32 %s14, 2
    %s21 = sadd.s32 %s14, 1
    %s22 = ssub.s32 %s14, %s21
    %p23 = scmp.eq.s32.totalorder %s22, 0
    %s25 = sadd.s32 %s24, 1
    %s26 = scalar_select %p23, %s24, %s25
    %p29 = pneg %p23
    %p30 = scmp.eq.s32.totalorder %s14, 1
    %p31 = por %p29, %p30
    %p32 = scmp.ne.s32.totalorder %s24, %s27
    %p33 = scmp.eq.s32.totalorder %s14, 0
    %p34 = por %p32, %p33
    %p35 = scmp.ne.s32.totalorder %s24, %s27
    %p36 = scmp.eq.s32.totalorder %s19, 1
    %p37 = por %p35, %p36
    %p38 = scmp.ne.s32.totalorder %s27, %s28
    %p39 = scmp.eq.s32.totalorder %s19, 0
    %p40 = por %p38, %p39
    %p41 = scmp.ne.s32.totalorder %s27, %s28
    %p42 = scmp.eq.s32.totalorder %s20, 1
    %p43 = por %p41, %p42
    %p45 = scmp.ne.s32.totalorder %s28, %s44
    %p46 = scmp.eq.s32.totalorder %s20, 0
    %p47 = por %p45, %p46
    %s49 = sadd.s32 %s48, 1
    %p52 = scmp.eq.s32.totalorder %s14, 1
    %p53 = scmp.ne.s32.totalorder %s48, %s50
    %p54 = scmp.eq.s32.totalorder %s14, 0
    %p55 = por %p53, %p54
    %p56 = scmp.ne.s32.totalorder %s48, %s50
    %p57 = scmp.eq.s32.totalorder %s19, 1
    %p58 = por %p56, %p57
    %p59 = scmp.ne.s32.totalorder %s50, %s51
    %p60 = scmp.eq.s32.totalorder %s19, 0
    %p61 = por %p59, %p60
    %p62 = scmp.ne.s32.totalorder %s50, %s51
    %p63 = scmp.eq.s32.totalorder %s20, 1
    %p64 = por %p62, %p63
    %p66 = scmp.ne.s32.totalorder %s51, %s65
    %p67 = scmp.eq.s32.totalorder %s20, 0
    %p68 = por %p66, %p67
    %s69 = ssub.s32 %s14, %s21
    %p70 = scmp.eq.s32.totalorder %s69, 0
    %s72 = sadd.s32 %s71, 1
    %s73 = scalar_select %p70, %s71, %s72
    %p76 = pneg %p70
    %p77 = scmp.eq.s32.totalorder %s14, 1
    %p78 = por %p76, %p77
    %p79 = scmp.ne.s32.totalorder %s71, %s74
    %p80 = scmp.eq.s32.totalorder %s14, 0
    %p81 = por %p79, %p80
    %p82 = scmp.ne.s32.totalorder %s71, %s74
    %p83 = scmp.eq.s32.totalorder %s19, 1
    %p84 = por %p82, %p83
    %p85 = scmp.ne.s32.totalorder %s74, %s75
    %p86 = scmp.eq.s32.totalorder %s19, 0
    %p87 = por %p85, %p86
    %p88 = scmp.ne.s32.totalorder %s74, %s75
    %p89 = scmp.eq.s32.totalorder %s20, 1
    %p90 = por %p88, %p89
    %p92 = scmp.ne.s32.totalorder %s75, %s91
    %p93 = scmp.eq.s32.totalorder %s20, 0
    %p94 = por %p92, %p93
    %s96 = sadd.s32 %s95, 1
    %p99 = scmp.eq.s32.totalorder %s14, 1
    %p100 = scmp.ne.s32.totalorder %s95, %s97
    %p101 = scmp.eq.s32.totalorder %s14, 0
    %p102 = por %p100, %p101
    %p103 = scmp.ne.s32.totalorder %s95, %s97
    %p104 = scmp.eq.s32.totalorder %s19, 1
    %p105 = por %p103, %p104
    %p106 = scmp.ne.s32.totalorder %s97, %s98
    %p107 = scmp.eq.s32.totalorder %s19, 0
    %p108 = por %p106, %p107
    %p109 = scmp.ne.s32.totalorder %s97, %s98
    %p110 = scmp.eq.s32.totalorder %s20, 1
    %p111 = por %p109, %p110
    %p113 = scmp.ne.s32.totalorder %s98, %s112
    %p114 = scmp.eq.s32.totalorder %s20, 0
    %p115 = por %p113, %p114
    %s117 = sadd.s32 %s116, 1
    %p120 = scmp.eq.s32.totalorder %s14, 1
    %p121 = scmp.ne.s32.totalorder %s116, %s118
    %p122 = scmp.eq.s32.totalorder %s14, 0
    %p123 = por %p121, %p122
    %p124 = scmp.ne.s32.totalorder %s116, %s118
    %p125 = scmp.eq.s32.totalorder %s19, 1
    %p126 = por %p124, %p125
    %p127 = scmp.ne.s32.totalorder %s118, %s119
    %p128 = scmp.eq.s32.totalorder %s19, 0
    %p129 = por %p127, %p128
    %p130 = scmp.ne.s32.totalorder %s118, %s119
    %p131 = scmp.eq.s32.totalorder %s20, 1
    %p132 = por %p130, %p131
    %p134 = scmp.ne.s32.totalorder %s119, %s133
    %p135 = scmp.eq.s32.totalorder %s20, 0
    %p136 = por %p134, %p135
    %s138 = sadd.s32 %s137, 1
    %p141 = scmp.eq.s32.totalorder %s14, 1
    %p142 = scmp.ne.s32.totalorder %s137, %s139
    %p143 = scmp.eq.s32.totalorder %s14, 0
    %p144 = por %p142, %p143
    %p145 = scmp.ne.s32.totalorder %s137, %s139
    %p146 = scmp.eq.s32.totalorder %s19, 1
    %p147 = por %p145, %p146
    %p148 = scmp.ne.s32.totalorder %s139, %s140
    %p149 = scmp.eq.s32.totalorder %s19, 0
    %p150 = por %p148, %p149
    %p151 = scmp.ne.s32.totalorder %s139, %s140
    %p152 = scmp.eq.s32.totalorder %s20, 1
    %p153 = por %p151, %p152
    %p155 = scmp.ne.s32.totalorder %s140, %s154
    %p156 = scmp.eq.s32.totalorder %s20, 0
    %p157 = por %p155, %p156
    %s159 = sadd.s32 %s158, 1
    %p162 = scmp.eq.s32.totalorder %s14, 1
    %p163 = scmp.ne.s32.totalorder %s158, %s160
    %p164 = scmp.eq.s32.totalorder %s14, 0
    %p165 = por %p163, %p164
    %p166 = scmp.ne.s32.totalorder %s158, %s160
    %p167 = scmp.eq.s32.totalorder %s19, 1
    %p168 = por %p166, %p167
    %p169 = scmp.ne.s32.totalorder %s160, %s161
    %p170 = scmp.eq.s32.totalorder %s19, 0
    %p171 = por %p169, %p170
    %p172 = scmp.ne.s32.totalorder %s160, %s161
    %p173 = scmp.eq.s32.totalorder %s20, 1
    %p174 = por %p172, %p173
    %p176 = scmp.ne.s32.totalorder %s161, %s175
    %p177 = scmp.eq.s32.totalorder %s20, 0
    %p178 = por %p176, %p177
    %s180 = sadd.s32 %s179, 1
    %p183 = scmp.eq.s32.totalorder %s14, 1
    %p184 = scmp.ne.s32.totalorder %s179, %s181
    %p185 = scmp.eq.s32.totalorder %s14, 0
    %p186 = por %p184, %p185
    %p187 = scmp.ne.s32.totalorder %s179, %s181
    %p188 = scmp.eq.s32.totalorder %s19, 1
    %p189 = por %p187, %p188
    %p190 = scmp.ne.s32.totalorder %s181, %s182
    %p191 = scmp.eq.s32.totalorder %s19, 0
    %p192 = por %p190, %p191
    %p193 = scmp.ne.s32.totalorder %s181, %s182
    %p194 = scmp.eq.s32.totalorder %s20, 1
    %p195 = por %p193, %p194
    %p197 = scmp.ne.s32.totalorder %s182, %s196
    %p198 = scmp.eq.s32.totalorder %s20, 0
    %p199 = por %p197, %p198
    %s200 = ssub.s32 %s14, %s21
    %p201 = scmp.eq.s32.totalorder %s200, 0
    %s203 = sadd.s32 %s202, 1
    %s204 = scalar_select %p201, %s202, %s203
    %p207 = pneg %p201
    %p208 = scmp.eq.s32.totalorder %s14, 1
    %p209 = por %p207, %p208
    %p210 = scmp.ne.s32.totalorder %s202, %s205
    %p211 = scmp.eq.s32.totalorder %s14, 0
    %p212 = por %p210, %p211
    %p213 = scmp.ne.s32.totalorder %s202, %s205
    %p214 = scmp.eq.s32.totalorder %s19, 1
    %p215 = por %p213, %p214
    %p216 = scmp.ne.s32.totalorder %s205, %s206
    %p217 = scmp.eq.s32.totalorder %s19, 0
    %p218 = por %p216, %p217
    %p219 = scmp.ne.s32.totalorder %s205, %s206
    %p220 = scmp.eq.s32.totalorder %s20, 1
    %p221 = por %p219, %p220
    %p223 = scmp.ne.s32.totalorder %s206, %s222
    %p224 = scmp.eq.s32.totalorder %s20, 0
    %p225 = por %p223, %p224
    %p226 = scmp.le.s32.totalorder 1, %s14
    %p227 = scmp.lt.s32.totalorder %s14, 3
    %p228 = pnand %p226, %p227
    %p229 = pneg %p228
    // Predicated region
    $region9: #{basic_block_forward.1} parent=5 // pred_check
      _
    $region10: #{basic_block_forward.1} parent=5 // pred_check_branch
      %231 = sbr.rel (%p228) target = $region12
    $region11: #{basic_block_forward.1} parent=5 // pred_region
      %s232 = ssub.s32 %s14, 1
      // Predicated region
      $region13: #{basic_block_forward.1} parent=11 // pred_check
        %p233 = pneg %p61
      $region14: #{basic_block_forward.1} parent=11 // pred_check_branch
        %235 = sbr.rel (%p233) target = $region16
      $region15: #{basic_block_forward.1} parent=11 // pred_region
        _
      $region16: #{basic_block_forward.1} parent=11 // pred_fallthru
        _
      // Predicated region
      $region17: #{basic_block_forward.1} parent=11 // pred_check
        %p236 = pneg %p108
      $region18: #{basic_block_forward.1} parent=11 // pred_check_branch
        %238 = sbr.rel (%p236) target = $region20
      $region19: #{basic_block_forward.1} parent=11 // pred_region
        _
      $region20: #{basic_block_forward.1} parent=11 // pred_fallthru
        _
      // Predicated region
      $region21: #{basic_block_forward.1} parent=11 // pred_check
        %p239 = pneg %p129
      $region22: #{basic_block_forward.1} parent=11 // pred_check_branch
        %241 = sbr.rel (%p239) target = $region24
      $region23: #{basic_block_forward.1} parent=11 // pred_region
        _
      $region24: #{basic_block_forward.1} parent=11 // pred_fallthru
        _
      // Predicated region
      $region25: #{basic_block_forward.1} parent=11 // pred_check
        %p242 = pneg %p150
      $region26: #{basic_block_forward.1} parent=11 // pred_check_branch
        %244 = sbr.rel (%p242) target = $region28
      $region27: #{basic_block_forward.1} parent=11 // pred_region
        _
      $region28: #{basic_block_forward.1} parent=11 // pred_fallthru
        _
      // Predicated region
      $region29: #{basic_block_forward.1} parent=11 // pred_check
        %p245 = pneg %p171
      $region30: #{basic_block_forward.1} parent=11 // pred_check_branch
        %247 = sbr.rel (%p245) target = $region32
      $region31: #{basic_block_forward.1} parent=11 // pred_region
        _
      $region32: #{basic_block_forward.1} parent=11 // pred_fallthru
        _
      // Predicated region
      $region33: #{basic_block_forward.1} parent=11 // pred_check
        %p248 = pneg %p192
      $region34: #{basic_block_forward.1} parent=11 // pred_check_branch
        %250 = sbr.rel (%p248) target = $region36
      $region35: #{basic_block_forward.1} parent=11 // pred_region
        _
      $region36: #{basic_block_forward.1} parent=11 // pred_fallthru
        _
    $region12: #{basic_block_forward.1} parent=5 // pred_fallthru
      _
    %p251 = scmp.lt.s32.totalorder %s14, 2
    // Predicated region
    $region37: #{basic_block_forward.1} parent=5 // pred_check
      %p252 = pneg %p251
    $region38: #{basic_block_forward.1} parent=5 // pred_check_branch
      %254 = sbr.rel (%p252) target = $region40
    $region39: #{basic_block_forward.1} parent=5 // pred_region
      // Predicated region
      $region41: #{basic_block_forward.1} parent=39 // pred_check
        %p255 = pneg %p34
      $region42: #{basic_block_forward.1} parent=39 // pred_check_branch
        %257 = sbr.rel (%p255) target = $region44
      $region43: #{basic_block_forward.1} parent=39 // pred_region
        %p258 = scmp.lt.s32.totalorder %s14, 1
        %s259 = scalar_select %p258, %s14, 1
        %s260 = smul.addr %s259, 3
        %s261 = smul.addr %s260, 4
        %s262 = scalar_lea.vmem %s0, %s261
      $region44: #{basic_block_forward.1} parent=39 // pred_fallthru
        _
      // Predicated region
      $region45: #{basic_block_forward.1} parent=39 // pred_check
        %p263 = pneg %p81
      $region46: #{basic_block_forward.1} parent=39 // pred_check_branch
        %265 = sbr.rel (%p263) target = $region48
      $region47: #{basic_block_forward.1} parent=39 // pred_region
        %p266 = scmp.lt.s32.totalorder %s14, 1
        %s267 = scalar_select %p266, %s14, 1
        %s268 = smul.addr %s267, 8
        %s269 = scalar_lea.vmem %s2, %s268
      $region48: #{basic_block_forward.1} parent=39 // pred_fallthru
        _
    $region40: #{basic_block_forward.1} parent=5 // pred_fallthru
      _
    %p270 = scmp.le.s32.totalorder 1, %s14
    %p271 = scmp.lt.s32.totalorder %s14, 3
    %p272 = pnand %p270, %p271
    %p273 = pneg %p272
    // Predicated region
    $region49: #{basic_block_forward.1} parent=5 // pred_check
      _
    $region50: #{basic_block_forward.1} parent=5 // pred_check_branch
      %275 = sbr.rel (%p272) target = $region52
    $region51: #{basic_block_forward.1} parent=5 // pred_region
      %s276 = ssub.s32 %s14, 1
      %p277 = scmp.lt.s32.totalorder %s19, 1
      %s278 = scalar_select %p277, %s19, 1
      %s279 = smul.addr %s278, 3
      %s280 = smul.addr %s279, 4
      %s281 = scalar_lea.vmem %s0, %s280
      %p282 = pneg %p40
      %p283 = pneg %p37
      %p284 = pneg %p61
      %p285 = pneg %p58
      %p286 = scmp.lt.s32.totalorder %s19, 1
      %s287 = scalar_select %p286, %s19, 1
      %s288 = smul.addr %s287, 8
      %s289 = scalar_lea.vmem %s2, %s288
      %p290 = pneg %p87
      %p291 = pneg %p84
      %p292 = pneg %p108
      %p293 = pneg %p105
      %p294 = pneg %p129
      %p295 = pneg %p126
      %p296 = pneg %p150
      %p297 = pneg %p147
      %p298 = pneg %p171
      %p299 = pneg %p168
      %p300 = pneg %p192
      %p301 = pneg %p189
      %p302 = pneg %p218
      %p303 = pneg %p215
      %p304 = scmp.lt.s32.totalorder %s19, 1
      %s305 = scalar_select %p304, %s19, 1
      %s306 = smul.addr %s305, 3
      %s307 = smul.addr %s306, 8
      %s308 = scalar_lea.vmem %s8, %s307
      %p309 = scmp.lt.s32.totalorder %s19, 1
      %s310 = scalar_select %p309, %s19, 1
      %s311 = smul.addr %s310, 3
      %s312 = smul.addr %s311, 4
      %s313 = scalar_lea.vmem %s0, %s312
      %p314 = scmp.lt.s32.totalorder %s19, 1
      %s315 = scalar_select %p314, %s19, 1
      %s316 = smul.addr %s315, 8
      %s317 = scalar_lea.vmem %s2, %s316
      %p318 = scmp.lt.s32.totalorder %s19, 1
      %s319 = scalar_select %p318, %s19, 1
      %s320 = smul.addr %s319, 3
      %s321 = smul.addr %s320, 8
      %s322 = scalar_lea.vmem %s8, %s321
      %v324 = vld [vmem:[%s313] sm:$0xff]
      %v325 = vld [vmem:[%s313 + $0x8] sm:$0xf]
      %v328 = vcombine.high %v324, %v324
      %v330 = vcombine.low %v324, %v324
      %v331 = vcombine.low %v325, %v325
      %332 = vrot.lane.b32.xlu0 %v330, 127
      %v333 = vpop.permute.xlu0 %332
      %334 = vrot.lane.b32.xlu0 %v324, 127
      %v335 = vpop.permute.xlu0 %334
      %336 = vrot.lane.b32.xlu0 %v331, 127
      %v337 = vpop.permute.xlu0 %336
      %vm338 = vcmask 1039360
      %v339 = vsel %vm338, %v333, %v335
      %v340 = vsel %vm338, %v335, %v337
      %344 = vrot.lane.b32.xlu0 %v324, 126
      %v345 = vpop.permute.xlu0 %344
      %346 = vrot.lane.b32.xlu0 %v328, 126
      %v347 = vpop.permute.xlu0 %346
      %348 = vrot.lane.b32.xlu0 %v325, 126
      %v349 = vpop.permute.xlu0 %348
      %vm350 = vcmask 1031168
      %v351 = vsel %vm350, %v345, %v347
      %v352 = vsel %vm350, %v347, %v349
      %356 = vrot.lane.b32.xlu0 %v330, 110
      %v357 = vpop.permute.xlu0 %356
      %358 = vrot.lane.b32.xlu0 %v324, 110
      %v359 = vpop.permute.xlu0 %358
      %360 = vrot.lane.b32.xlu0 %v331, 110
      %v361 = vpop.permute.xlu0 %360
      %vm362 = vcmask 900096
      %v363 = vsel %vm362, %v357, %v359
      %v364 = vsel %vm362, %v359, %v361
      %368 = vrot.lane.b32.xlu0 %v324, 109
      %v369 = vpop.permute.xlu0 %368
      %370 = vrot.lane.b32.xlu0 %v328, 109
      %v371 = vpop.permute.xlu0 %370
      %372 = vrot.lane.b32.xlu0 %v325, 109
      %v373 = vpop.permute.xlu0 %372
      %vm374 = vcmask 891904
      %v375 = vsel %vm374, %v369, %v371
      %v376 = vsel %vm374, %v371, %v373
      %380 = vrot.lane.b32.xlu0 %v330, 108
      %v381 = vpop.permute.xlu0 %380
      %382 = vrot.lane.b32.xlu0 %v324, 108
      %v383 = vpop.permute.xlu0 %382
      %384 = vrot.lane.b32.xlu0 %v331, 108
      %v385 = vpop.permute.xlu0 %384
      %vm386 = vcmask 883712
      %v387 = vsel %vm386, %v381, %v383
      %v388 = vsel %vm386, %v383, %v385
      %392 = vrot.lane.b32.xlu0 %v324, 92
      %v393 = vpop.permute.xlu0 %392
      %394 = vrot.lane.b32.xlu0 %v328, 92
      %v395 = vpop.permute.xlu0 %394
      %396 = vrot.lane.b32.xlu0 %v325, 92
      %v397 = vpop.permute.xlu0 %396
      %vm398 = vcmask 752640
      %v399 = vsel %vm398, %v393, %v395
      %v400 = vsel %vm398, %v395, %v397
      %404 = vrot.lane.b32.xlu0 %v330, 91
      %v405 = vpop.permute.xlu0 %404
      %406 = vrot.lane.b32.xlu0 %v324, 91
      %v407 = vpop.permute.xlu0 %406
      %408 = vrot.lane.b32.xlu0 %v331, 91
      %v409 = vpop.permute.xlu0 %408
      %vm410 = vcmask 744448
      %v411 = vsel %vm410, %v405, %v407
      %v412 = vsel %vm410, %v407, %v409
      %416 = vrot.lane.b32.xlu0 %v324, 90
      %v417 = vpop.permute.xlu0 %416
      %418 = vrot.lane.b32.xlu0 %v328, 90
      %v419 = vpop.permute.xlu0 %418
      %420 = vrot.lane.b32.xlu0 %v325, 90
      %v421 = vpop.permute.xlu0 %420
      %vm422 = vcmask 736256
      %v423 = vsel %vm422, %v417, %v419
      %v424 = vsel %vm422, %v419, %v421
      %vm428 = vcmask 1043456
      %v429 = vsel %vm428, %v324, %v339
      %v430 = vsel %vm428, %v328, %v340
      %v431 = vsel %vm428, %v325, %v337
      %v432 = vsel %vm428, %v351, %v363
      %v433 = vsel %vm428, %v352, %v364
      %v434 = vsel %vm428, %v349, %v361
      %v435 = vsel %vm428, %v375, %v387
      %v436 = vsel %vm428, %v376, %v388
      %v437 = vsel %vm428, %v373, %v385
      %v438 = vsel %vm428, %v399, %v411
      %v439 = vsel %vm428, %v400, %v412
      %v440 = vsel %vm428, %v397, %v409
      %v441 = vld [vmem:[%s3] sm:$0xf]
      %v442 = vpack.c.bf16 %v432, %v429
      %v443 = vpack.c.bf16 %v433, %v430
      %v444 = vpack.c.bf16 %v434, %v431
      %v445 = vpack.c.bf16 %v438, %v435
      %v446 = vpack.c.bf16 %v439, %v436
      %v447 = vpack.c.bf16 %v440, %v437
      %v448 = vpack.c.bf16 %v423, %v423
      %v449 = vpack.c.bf16 %v424, %v424
      %v450 = vpack.c.bf16 %v421, %v421
      %v451 = vld [vmem:[%s317] sm:$0xff]
      %453 = vset.pattern.permute.xlu0 0
      %454 = vperm.xlu0 %453, %v451
      %v455 = vpop.permute.xlu0 %454
      %vm457 = vcmask 293888
      %v459 = vsel %vm457, %v441, 0
      %vm461 = vcmask 1041408
      %v463 = vsel %vm461, %v448, 0
      %v466 = vsel %vm461, %v449, 0
      %v469 = vsel %vm461, %v450, 0
      %471 = vmatprep.subr.bf16.mxu0 %v443
      %472 = vmatpush1.bf16.msra.mxu0 %v442
      %473 = vmatprep.subr.bf16.mxu0 %v446
      %474 = vmatpush1.bf16.msra.mxu0 %v445
      %475 = vmatprep.subr.bf16.mxu0 %v466
      %476 = vmatpush1.bf16.msra.mxu0 %v463
      %477 = vmatprep.subr.bf16.mxu0 0
      %478 = vmatpush1.bf16.msra.mxu0 0
      %479 = vmatprep.subr.bf16.mxu0 0
      %480 = vmatpush1.bf16.msra.mxu0 0
      %481 = vmatprep.subr.bf16.mxu0 0
      %482 = vmatpush1.bf16.msra.mxu0 0
      %483 = vmatprep.subr.bf16.mxu0 0
      %484 = vmatpush1.bf16.msra.mxu0 0
      %485 = vmatprep.subr.bf16.mxu0 0
      %486 = vmatpush1.bf16.msra.mxu0 0
      %487 = vmatprep.subr.bf16.mxu0 0
      %488 = vmatpush1.bf16.msra.mxu0 0
      %489 = vmatprep.subr.bf16.mxu0 0
      %490 = vmatpush1.bf16.msra.mxu0 0
      %491 = vmatprep.subr.bf16.mxu0 0
      %492 = vmatpush1.bf16.msra.mxu0 0
      %493 = vmatprep.subr.bf16.mxu0 0
      %494 = vmatpush1.bf16.msra.mxu0 0
      %495 = vmatprep.subr.bf16.mxu0 0
      %496 = vmatpush1.bf16.msra.mxu0 0
      %497 = vmatprep.subr.bf16.mxu0 0
      %498 = vmatpush1.bf16.msra.mxu0 0
      %499 = vmatprep.subr.bf16.mxu0 0
      %500 = vmatpush1.bf16.msra.mxu0 0
      %501 = vmatprep.subr.bf16.mxu0 0
      %502 = vmatpush1.bf16.msra.mxu0 0
      %503 = vmatprep.mubr.bf16.mxu0 0
      %504 = vmatmul.mubr.bf16.gmra.mrb[0].mxu0 %v459
      %v505 = vpop.f32.mrb[0].mxu0
      %v506 = vadd.f32 %v455, %v505
      %v507 = vpop.f32.mrb[0].mxu0
      %v508 = vadd.f32 %v455, %v507
      %v509 = vpop.f32.mrb[0].mxu0
      %v510 = vpop.f32.mrb[0].mxu0
      %511 = vdwg.mxu0
      %512 = vmatprep.subr.bf16.mxu0 0
      %513 = vmatpush1.bf16.msra.mxu0 %v444
      %514 = vmatprep.subr.bf16.mxu0 0
      %515 = vmatpush1.bf16.msra.mxu0 %v447
      %516 = vmatprep.subr.bf16.mxu0 0
      %517 = vmatpush1.bf16.msra.mxu0 %v469
      %518 = vmatprep.subr.bf16.mxu0 0
      %519 = vmatpush1.bf16.msra.mxu0 0
      %520 = vmatprep.subr.bf16.mxu0 0
      %521 = vmatpush1.bf16.msra.mxu0 0
      %522 = vmatprep.subr.bf16.mxu0 0
      %523 = vmatpush1.bf16.msra.mxu0 0
      %524 = vmatprep.subr.bf16.mxu0 0
      %525 = vmatpush1.bf16.msra.mxu0 0
      %526 = vmatprep.subr.bf16.mxu0 0
      %527 = vmatpush1.bf16.msra.mxu0 0
      %528 = vmatprep.subr.bf16.mxu0 0
      %529 = vmatpush1.bf16.msra.mxu0 0
      %530 = vmatprep.subr.bf16.mxu0 0
      %531 = vmatpush1.bf16.msra.mxu0 0
      %532 = vmatprep.subr.bf16.mxu0 0
      %533 = vmatpush1.bf16.msra.mxu0 0
      %534 = vmatprep.subr.bf16.mxu0 0
      %535 = vmatpush1.bf16.msra.mxu0 0
      %536 = vmatprep.subr.bf16.mxu0 0
      %537 = vmatpush1.bf16.msra.mxu0 0
      %538 = vmatprep.subr.bf16.mxu0 0
      %539 = vmatpush1.bf16.msra.mxu0 0
      %540 = vmatprep.subr.bf16.mxu0 0
      %541 = vmatpush1.bf16.msra.mxu0 0
      %542 = vmatprep.subr.bf16.mxu0 0
      %543 = vmatpush1.bf16.msra.mxu0 0
      %544 = vmatprep.mubr.bf16.mxu0 0
      %545 = vmatmul.mubr.bf16.gmra.mrb[0].mxu0 %v459
      %v546 = vpop.f32.mrb[0].mxu0
      %v547 = vadd.f32 %v455, %v546
      %v548 = vpop.f32.mrb[0].mxu0
      %v549 = vpop.f32.mrb[0].mxu0
      %v550 = vpop.f32.mrb[0].mxu0
      %551 = vdwg.mxu0
      %v552 = vmax.f32 %v506, 0.0
      %v553 = vmax.f32 %v508, 0.0
      %v554 = vmax.f32 %v547, 0.0
      %v555 = vld [vmem:[%s1] sm:$0x7]
      %v557 = vlaneseq
      %v558 = vshrl.u32 %v557, 7
      %v559 = vsub.s32 0, %v558
      %v560 = vrot.slane %v555, %v559
      %v561 = vlaneseq
      %v562 = vshrl.u32 %v561, 7
      %v563 = vsub.s32 1, %v562
      %v564 = vrot.slane %v555, %v563
      %v565 = vlaneseq
      %v566 = vshrl.u32 %v565, 7
      %v567 = vsub.s32 2, %v566
      %v568 = vrot.slane %v555, %v567
      %v572 = vmul.f32 %v552, %v560
      %v573 = vmul.f32 %v553, %v564
      %v574 = vmul.f32 %v554, %v568
      %575 = vst [vmem:[#allocation2] sm:$0xff] 0.0
      %576 = vst [vmem:[#allocation2 + $0x8] sm:$0xff] 0.0
      %vm577 = vcmask 572416
      %578 = vst.msk [vmem:[#allocation2 + $0x10] sm:$0xff] %vm577, 0.0
      %582 = vrot.lane.b32.xlu0 %v572, 19
      %v583 = vpop.permute.xlu0 %582
      %584 = vrot.lane.b32.xlu0 %v573, 19
      %v585 = vpop.permute.xlu0 %584
      %586 = vrot.lane.b32.xlu0 %v574, 19
      %v587 = vpop.permute.xlu0 %586
      %vm588 = vcmask 154624
      %v589 = vsel %vm588, %v583, %v585
      %v590 = vsel %vm588, %v585, %v587
      %vm594 = vcmask 1047704
      %595 = vst.msk [vmem:[#allocation2] sm:$0xff] %vm594, %v583
      %596 = vst [vmem:[#allocation2 + $0x8] sm:$0xff] %v589
      %vm597 = vcmask 416768
      %598 = vst.msk [vmem:[#allocation2 + $0x10] sm:$0xff] %vm597, %v590
      %v599 = vld [vmem:[#allocation2] sm:$0xff]
      %v600 = vld [vmem:[#allocation2 + $0x8] sm:$0xff]
      %v601 = vld [vmem:[#allocation2 + $0x10] sm:$0xff]
      %605 = vrot.lane.b32.xlu0 %v599, 127
      %v606 = vpop.permute.xlu0 %605
      %607 = vrot.lane.b32.xlu0 %v600, 127
      %v608 = vpop.permute.xlu0 %607
      %609 = vrot.lane.b32.xlu0 %v601, 127
      %v610 = vpop.permute.xlu0 %609
      %v611 = vsel %vm338, %v606, %v608
      %v612 = vsel %vm338, %v608, %v610
      %616 = vrot.lane.b32.xlu0 %v599, 126
      %v617 = vpop.permute.xlu0 %616
      %618 = vrot.lane.b32.xlu0 %v600, 126
      %v619 = vpop.permute.xlu0 %618
      %620 = vrot.lane.b32.xlu0 %v601, 126
      %v621 = vpop.permute.xlu0 %620
      %v622 = vsel %vm350, %v617, %v619
      %v623 = vsel %vm350, %v619, %v621
      %627 = vrot.lane.b32.xlu0 %v599, 110
      %v628 = vpop.permute.xlu0 %627
      %629 = vrot.lane.b32.xlu0 %v600, 110
      %v630 = vpop.permute.xlu0 %629
      %631 = vrot.lane.b32.xlu0 %v601, 110
      %v632 = vpop.permute.xlu0 %631
      %v633 = vsel %vm362, %v628, %v630
      %v634 = vsel %vm362, %v630, %v632
      %638 = vrot.lane.b32.xlu0 %v599, 109
      %v639 = vpop.permute.xlu0 %638
      %640 = vrot.lane.b32.xlu0 %v600, 109
      %v641 = vpop.permute.xlu0 %640
      %642 = vrot.lane.b32.xlu0 %v601, 109
      %v643 = vpop.permute.xlu0 %642
      %v644 = vsel %vm374, %v639, %v641
      %v645 = vsel %vm374, %v641, %v643
      %649 = vrot.lane.b32.xlu0 %v599, 108
      %v650 = vpop.permute.xlu0 %649
      %651 = vrot.lane.b32.xlu0 %v600, 108
      %v652 = vpop.permute.xlu0 %651
      %653 = vrot.lane.b32.xlu0 %v601, 108
      %v654 = vpop.permute.xlu0 %653
      %v655 = vsel %vm386, %v650, %v652
      %v656 = vsel %vm386, %v652, %v654
      %660 = vrot.lane.b32.xlu0 %v599, 92
      %v661 = vpop.permute.xlu0 %660
      %662 = vrot.lane.b32.xlu0 %v600, 92
      %v663 = vpop.permute.xlu0 %662
      %664 = vrot.lane.b32.xlu0 %v601, 92
      %v665 = vpop.permute.xlu0 %664
      %v666 = vsel %vm398, %v661, %v663
      %v667 = vsel %vm398, %v663, %v665
      %671 = vrot.lane.b32.xlu0 %v599, 91
      %v672 = vpop.permute.xlu0 %671
      %673 = vrot.lane.b32.xlu0 %v600, 91
      %v674 = vpop.permute.xlu0 %673
      %675 = vrot.lane.b32.xlu0 %v601, 91
      %v676 = vpop.permute.xlu0 %675
      %v677 = vsel %vm410, %v672, %v674
      %v678 = vsel %vm410, %v674, %v676
      %682 = vrot.lane.b32.xlu0 %v599, 90
      %v683 = vpop.permute.xlu0 %682
      %684 = vrot.lane.b32.xlu0 %v600, 90
      %v685 = vpop.permute.xlu0 %684
      %686 = vrot.lane.b32.xlu0 %v601, 90
      %v687 = vpop.permute.xlu0 %686
      %v688 = vsel %vm422, %v683, %v685
      %v689 = vsel %vm422, %v685, %v687
      %v693 = vld [vmem:[%s4] sm:$0xf]
      %v694 = vpack.c.bf16 %v611, %v599
      %v695 = vpack.c.bf16 %v612, %v600
      %v696 = vpack.c.bf16 %v610, %v601
      %v697 = vpack.c.bf16 %v633, %v622
      %v698 = vpack.c.bf16 %v634, %v623
      %v699 = vpack.c.bf16 %v632, %v621
      %v700 = vpack.c.bf16 %v655, %v644
      %v701 = vpack.c.bf16 %v656, %v645
      %v702 = vpack.c.bf16 %v654, %v643
      %v703 = vpack.c.bf16 %v677, %v666
      %v704 = vpack.c.bf16 %v678, %v667
      %v705 = vpack.c.bf16 %v676, %v665
      %v706 = vpack.c.bf16 %v688, %v688
      %v707 = vpack.c.bf16 %v689, %v689
      %v708 = vpack.c.bf16 %v687, %v687
      %v709 = vld [vmem:[%s5] sm:$0xff]
      %711 = vset.pattern.permute.xlu0 0
      %712 = vperm.xlu0 %711, %v709
      %v713 = vpop.permute.xlu0 %712
      %vm715 = vcmask 588800
      %v717 = vsel %vm715, %v693, 0
      %v720 = vsel %vm428, %v706, 0
      %v723 = vsel %vm428, %v707, 0
      %v726 = vsel %vm428, %v708, 0
      %728 = vmatprep.subr.bf16.mxu0 %v695
      %729 = vmatpush1.bf16.msra.mxu0 %v694
      %730 = vmatprep.subr.bf16.mxu0 %v698
      %731 = vmatpush1.bf16.msra.mxu0 %v697
      %732 = vmatprep.subr.bf16.mxu0 %v701
      %733 = vmatpush1.bf16.msra.mxu0 %v700
      %734 = vmatprep.subr.bf16.mxu0 %v704
      %735 = vmatpush1.bf16.msra.mxu0 %v703
      %736 = vmatprep.subr.bf16.mxu0 %v723
      %737 = vmatpush1.bf16.msra.mxu0 %v720
      %738 = vmatprep.subr.bf16.mxu0 0
      %739 = vmatpush1.bf16.msra.mxu0 0
      %740 = vmatprep.subr.bf16.mxu0 0
      %741 = vmatpush1.bf16.msra.mxu0 0
      %742 = vmatprep.subr.bf16.mxu0 0
      %743 = vmatpush1.bf16.msra.mxu0 0
      %744 = vmatprep.subr.bf16.mxu0 0
      %745 = vmatpush1.bf16.msra.mxu0 0
      %746 = vmatprep.subr.bf16.mxu0 0
      %747 = vmatpush1.bf16.msra.mxu0 0
      %748 = vmatprep.subr.bf16.mxu0 0
      %749 = vmatpush1.bf16.msra.mxu0 0
      %750 = vmatprep.subr.bf16.mxu0 0
      %751 = vmatpush1.bf16.msra.mxu0 0
      %752 = vmatprep.subr.bf16.mxu0 0
      %753 = vmatpush1.bf16.msra.mxu0 0
      %754 = vmatprep.subr.bf16.mxu0 0
      %755 = vmatpush1.bf16.msra.mxu0 0
      %756 = vmatprep.subr.bf16.mxu0 0
      %757 = vmatpush1.bf16.msra.mxu0 0
      %758 = vmatprep.subr.bf16.mxu0 0
      %759 = vmatpush1.bf16.msra.mxu0 0
      %760 = vmatprep.mubr.bf16.mxu0 0
      %761 = vmatmul.mubr.bf16.gmra.mrb[0].mxu0 %v717
      %v762 = vpop.f32.mrb[0].mxu0
      %v763 = vadd.f32 %v713, %v762
      %v764 = vpop.f32.mrb[0].mxu0
      %v765 = vadd.f32 %v713, %v764
      %v766 = vpop.f32.mrb[0].mxu0
      %v767 = vpop.f32.mrb[0].mxu0
      %768 = vdwg.mxu0
      %769 = vmatprep.subr.bf16.mxu0 0
      %770 = vmatpush1.bf16.msra.mxu0 %v696
      %771 = vmatprep.subr.bf16.mxu0 0
      %772 = vmatpush1.bf16.msra.mxu0 %v699
      %773 = vmatprep.subr.bf16.mxu0 0
      %774 = vmatpush1.bf16.msra.mxu0 %v702
      %775 = vmatprep.subr.bf16.mxu0 0
      %776 = vmatpush1.bf16.msra.mxu0 %v705
      %777 = vmatprep.subr.bf16.mxu0 0
      %778 = vmatpush1.bf16.msra.mxu0 %v726
      %779 = vmatprep.subr.bf16.mxu0 0
      %780 = vmatpush1.bf16.msra.mxu0 0
      %781 = vmatprep.subr.bf16.mxu0 0
      %782 = vmatpush1.bf16.msra.mxu0 0
      %783 = vmatprep.subr.bf16.mxu0 0
      %784 = vmatpush1.bf16.msra.mxu0 0
      %785 = vmatprep.subr.bf16.mxu0 0
      %786 = vmatpush1.bf16.msra.mxu0 0
      %787 = vmatprep.subr.bf16.mxu0 0
      %788 = vmatpush1.bf16.msra.mxu0 0
      %789 = vmatprep.subr.bf16.mxu0 0
      %790 = vmatpush1.bf16.msra.mxu0 0
      %791 = vmatprep.subr.bf16.mxu0 0
      %792 = vmatpush1.bf16.msra.mxu0 0
      %793 = vmatprep.subr.bf16.mxu0 0
      %794 = vmatpush1.bf16.msra.mxu0 0
      %795 = vmatprep.subr.bf16.mxu0 0
      %796 = vmatpush1.bf16.msra.mxu0 0
      %797 = vmatprep.subr.bf16.mxu0 0
      %798 = vmatpush1.bf16.msra.mxu0 0
      %799 = vmatprep.subr.bf16.mxu0 0
      %800 = vmatpush1.bf16.msra.mxu0 0
      %801 = vmatprep.mubr.bf16.mxu0 0
      %802 = vmatmul.mubr.bf16.gmra.mrb[0].mxu0 %v717
      %v803 = vpop.f32.mrb[0].mxu0
      %v804 = vadd.f32 %v713, %v803
      %v805 = vpop.f32.mrb[0].mxu0
      %v806 = vpop.f32.mrb[0].mxu0
      %v807 = vpop.f32.mrb[0].mxu0
      %808 = vdwg.mxu0
      %v809 = vld [vmem:[%s6] sm:$0xf]
      %v810 = vpack.c.bf16 %v324, %v324
      %v811 = vpack.c.bf16 %v328, %v328
      %v812 = vpack.c.bf16 %v325, %v325
      %v813 = vld [vmem:[%s7] sm:$0xff]
      %815 = vset.pattern.permute.xlu0 0
      %816 = vperm.xlu0 %815, %v813
      %v817 = vpop.permute.xlu0 %816
      %822 = vrot.lane.b32.xlu0 %v810, 109
      %v823 = vpop.permute.xlu0 %822
      %824 = vrot.lane.b32.xlu0 %v811, 109
      %v825 = vpop.permute.xlu0 %824
      %826 = vrot.lane.b32.xlu0 %v812, 109
      %v827 = vpop.permute.xlu0 %826
      %vm828 = vcmask 891904
      %v829 = vsel %vm828, %v823, %v825
      %v830 = vsel %vm828, %v825, %v827
      %vm831 = vcmask 31744
      %v833 = vsel %vm831, %v809, 0
      %v836 = vsel %vm461, %v829, 0
      %v839 = vsel %vm461, %v830, 0
      %v842 = vsel %vm461, %v827, 0
      %844 = vmatprep.subr.bf16.mxu0 %v839
      %845 = vmatpush1.bf16.msra.mxu0 %v836
      %846 = vmatprep.subr.bf16.mxu0 0
      %847 = vmatpush1.bf16.msra.mxu0 0
      %848 = vmatprep.subr.bf16.mxu0 0
      %849 = vmatpush1.bf16.msra.mxu0 0
      %850 = vmatprep.subr.bf16.mxu0 0
      %851 = vmatpush1.bf16.msra.mxu0 0
      %852 = vmatprep.subr.bf16.mxu0 0
      %853 = vmatpush1.bf16.msra.mxu0 0
      %854 = vmatprep.subr.bf16.mxu0 0
      %855 = vmatpush1.bf16.msra.mxu0 0
      %856 = vmatprep.subr.bf16.mxu0 0
      %857 = vmatpush1.bf16.msra.mxu0 0
      %858 = vmatprep.subr.bf16.mxu0 0
      %859 = vmatpush1.bf16.msra.mxu0 0
      %860 = vmatprep.subr.bf16.mxu0 0
      %861 = vmatpush1.bf16.msra.mxu0 0
      %862 = vmatprep.subr.bf16.mxu0 0
      %863 = vmatpush1.bf16.msra.mxu0 0
      %864 = vmatprep.subr.bf16.mxu0 0
      %865 = vmatpush1.bf16.msra.mxu0 0
      %866 = vmatprep.subr.bf16.mxu0 0
      %867 = vmatpush1.bf16.msra.mxu0 0
      %868 = vmatprep.subr.bf16.mxu0 0
      %869 = vmatpush1.bf16.msra.mxu0 0
      %870 = vmatprep.subr.bf16.mxu0 0
      %871 = vmatpush1.bf16.msra.mxu0 0
      %872 = vmatprep.subr.bf16.mxu0 0
      %873 = vmatpush1.bf16.msra.mxu0 0
      %874 = vmatprep.subr.bf16.mxu0 0
      %875 = vmatpush1.bf16.msra.mxu0 0
      %876 = vmatprep.mubr.bf16.mxu0 0
      %877 = vmatmul.mubr.bf16.gmra.mrb[0].mxu0 %v833
      %v878 = vpop.f32.mrb[0].mxu0
      %v879 = vadd.f32 %v817, %v878
      %v880 = vpop.f32.mrb[0].mxu0
      %v881 = vadd.f32 %v817, %v880
      %v882 = vpop.f32.mrb[0].mxu0
      %v883 = vpop.f32.mrb[0].mxu0
      %884 = vdwg.mxu0
      %885 = vmatprep.subr.bf16.mxu0 0
      %886 = vmatpush1.bf16.msra.mxu0 %v842
      %887 = vmatprep.subr.bf16.mxu0 0
      %888 = vmatpush1.bf16.msra.mxu0 0
      %889 = vmatprep.subr.bf16.mxu0 0
      %890 = vmatpush1.bf16.msra.mxu0 0
      %891 = vmatprep.subr.bf16.mxu0 0
      %892 = vmatpush1.bf16.msra.mxu0 0
      %893 = vmatprep.subr.bf16.mxu0 0
      %894 = vmatpush1.bf16.msra.mxu0 0
      %895 = vmatprep.subr.bf16.mxu0 0
      %896 = vmatpush1.bf16.msra.mxu0 0
      %897 = vmatprep.subr.bf16.mxu0 0
      %898 = vmatpush1.bf16.msra.mxu0 0
      %899 = vmatprep.subr.bf16.mxu0 0
      %900 = vmatpush1.bf16.msra.mxu0 0
      %901 = vmatprep.subr.bf16.mxu0 0
      %902 = vmatpush1.bf16.msra.mxu0 0
      %903 = vmatprep.subr.bf16.mxu0 0
      %904 = vmatpush1.bf16.msra.mxu0 0
      %905 = vmatprep.subr.bf16.mxu0 0
      %906 = vmatpush1.bf16.msra.mxu0 0
      %907 = vmatprep.subr.bf16.mxu0 0
      %908 = vmatpush1.bf16.msra.mxu0 0
      %909 = vmatprep.subr.bf16.mxu0 0
      %910 = vmatpush1.bf16.msra.mxu0 0
      %911 = vmatprep.subr.bf16.mxu0 0
      %912 = vmatpush1.bf16.msra.mxu0 0
      %913 = vmatprep.subr.bf16.mxu0 0
      %914 = vmatpush1.bf16.msra.mxu0 0
      %915 = vmatprep.subr.bf16.mxu0 0
      %916 = vmatpush1.bf16.msra.mxu0 0
      %917 = vmatprep.mubr.bf16.mxu0 0
      %918 = vmatmul.mubr.bf16.gmra.mrb[0].mxu0 %v833
      %v919 = vpop.f32.mrb[0].mxu0
      %v920 = vadd.f32 %v817, %v919
      %v921 = vpop.f32.mrb[0].mxu0
      %v922 = vpop.f32.mrb[0].mxu0
      %v923 = vpop.f32.mrb[0].mxu0
      %924 = vdwg.mxu0
      %v925 = vadd.f32 %v763, %v879
      %v926 = vadd.f32 %v765, %v881
      %v927 = vadd.f32 %v804, %v920
      %v928 = vmax.f32 %v925, 0.0
      %v929 = vmax.f32 %v926, 0.0
      %v930 = vmax.f32 %v927, 0.0
      %931 = vst [vmem:[%s322] sm:$0xff] %v928
      %932 = vst [vmem:[%s322 + $0x8] sm:$0xff] %v929
      %vm933 = vcmask 261120
      %934 = vst.msk [vmem:[%s322 + $0x10] sm:$0xff] %vm933, %v930
      %p935 = scmp.lt.s32.totalorder %s19, 1
      %s936 = scalar_select %p935, %s19, 1
      %s937 = smul.addr %s936, 3
      %s938 = smul.addr %s937, 8
      %s939 = scalar_lea.vmem %s8, %s938
      // Predicated region
      $region53: #{basic_block_forward.1} parent=51 // pred_check
        %p940 = pneg %p215
      $region54: #{basic_block_forward.1} parent=51 // pred_check_branch
        %942 = sbr.rel (%p940) target = $region56
      $region55: #{basic_block_forward.1} parent=51 // pred_region
        _
      $region56: #{basic_block_forward.1} parent=51 // pred_fallthru
        _
    $region52: #{basic_block_forward.1} parent=5 // pred_fallthru
      _
    %p943 = scmp.le.s32.totalorder 2, %s14
    // Predicated region
    $region57: #{basic_block_forward.1} parent=5 // pred_check
      %p944 = pneg %p943
    $region58: #{basic_block_forward.1} parent=5 // pred_check_branch
      %946 = sbr.rel (%p944) target = $region60
    $region59: #{basic_block_forward.1} parent=5 // pred_region
      %s947 = ssub.s32 %s14, 2
      // Predicated region
      $region61: #{basic_block_forward.1} parent=59 // pred_check
        %p948 = pneg %p221
      $region62: #{basic_block_forward.1} parent=59 // pred_check_branch
        %950 = sbr.rel (%p948) target = $region64
      $region63: #{basic_block_forward.1} parent=59 // pred_region
        %p951 = scmp.lt.s32.totalorder %s20, 1
        %s952 = scalar_select %p951, %s20, 1
        %s953 = smul.addr %s952, 3
        %s954 = smul.addr %s953, 8
        %s955 = scalar_lea.vmem %s8, %s954
      $region64: #{basic_block_forward.1} parent=59 // pred_fallthru
        _
    $region60: #{basic_block_forward.1} parent=5 // pred_fallthru
      _
  $region6: #{basic_block_forward.1} parent=0 // loop_footer
    %s18 = sadd.s32 1, %s14
  $region7: #{basic_block_forward.1} parent=0 // loop_footer_branch
    %13 = sbr.rel target = $region3
  $region8: #{basic_block_forward.1} parent=0 // loop_exit
    _

</llo_original>
